<compile_context>
chip_gen: v5e
topology: v5e:2x2
jax: 0.10.0
libtpu: 0.0.40
codegen_flags: <defaults>
</compile_context>

<pallas_src>
import functools

import jax
import jax.numpy as jnp
from jax.experimental import pallas as pl
from jax.experimental.pallas import tpu as pltpu


# ---------------------------------------------------------------------------
# Kernel
# ---------------------------------------------------------------------------
def dynamics_kernel(s_ref, a_ref,
                    w1s_ref, w1a_ref, b1_ref,
                    w2_ref, b2_ref,
                    w3_ref, dscale_ref, b3_ref,
                    out_ref):
    """Fused 3-layer MLP on one (features, tile_b) batch slab.

    Everything is feature-major: the batch sits on the 128-lane axis, so every
    load / VPU op / store is lane-dense. Input normalization is pre-folded
    into w1*/b1; the output affine is applied here in f32 (never folded into a
    possibly-bf16 w3). MXU accumulation is f32 on all paths.
    """
    h1 = (jnp.dot(w1s_ref[...], s_ref[...], preferred_element_type=jnp.float32)
          + jnp.dot(w1a_ref[...], a_ref[...], preferred_element_type=jnp.float32)
          + b1_ref[...])
    h1 = jnp.maximum(h1, 0.0)                                     # ReLU (VPU, f32)

    h2 = jnp.dot(w2_ref[...], h1.astype(w2_ref.dtype),
                 preferred_element_type=jnp.float32) + b2_ref[...]
    h2 = jnp.maximum(h2, 0.0)                                     # ReLU (VPU, f32)

    d = jnp.dot(w3_ref[...], h2.astype(w3_ref.dtype),
                preferred_element_type=jnp.float32)
    out_ref[...] = (d * dscale_ref[...] + b3_ref[...]).astype(out_ref.dtype)


# ---------------------------------------------------------------------------
# Tiling heuristics
# ---------------------------------------------------------------------------
def _round_up(x, m):
    return ((x + m - 1) // m) * m


def _tensorcores_per_chip():
    """Best-effort TensorCore count per chip (2 on v7x, else 1)."""
    try:
        kind = jax.devices()[0].device_kind.lower()
    except Exception:  # pragma: no cover - defensive
        return 1
    return 2 if ("v7" in kind or "7x" in kind) else 1


def _auto_tile_b(batch, *, cores=1, max_tile=8192):
    """Lane-dense (multiple-of-128) batch tile.

    v5e/v6e (1 TC): single largest tile covering the batch — fewest grid steps
    means the ~0.35 us per-step fixed cost is paid as rarely as possible.
    v7x (2 TC): additionally shrink the tile (never below 128) so the grid has
    >= 2 steps per TensorCore when the batch allows, restoring DMA/compute/
    writeback pipelining on both cores.
    """
    bp = _round_up(max(batch, 1), 128)
    t = min(bp, max_tile)
    if cores > 1:
        per_step = (bp // (2 * cores)) // 128 * 128
        if per_step >= 128:
            t = min(t, per_step)
    return max(128, t)


# ---------------------------------------------------------------------------
# Parameter preparation (call ONCE, reuse across forward calls)
# ---------------------------------------------------------------------------
def prepare_params(params, *, use_bf16=True):
    """Fold input normalization into layer 1, pre-transpose to feature-major,
    and cast weights to the compute dtype.

    This hoists ~10 fold/transpose/cast ops out of the per-call path. Biases,
    diff_scale and diff_mean stay f32 (applied in f32 inside the kernel).
    """
    S = params["w1s"].shape[0]
    A = params["w1a"].shape[0]
    H1 = params["w1s"].shape[1]
    H2 = params["w2"].shape[1]
    cdt = jnp.bfloat16 if use_bf16 else jnp.float32

    sm, ss = params["state_mean"], params["state_scale"]
    am, asc = params["action_mean"], params["action_scale"]
    dm, dsc = params["diff_mean"], params["diff_scale"]

    # ((x - m) / s) @ W == x @ (W / s^T) - (m / s) @ W
    w1s_f = params["w1s"] / ss.reshape(S, 1)
    w1a_f = params["w1a"] / asc.reshape(A, 1)
    b1_f = params["b1"] - (sm / ss) @ params["w1s"] - (am / asc) @ params["w1a"]

    # Output affine handled in f32 inside the kernel (NOT folded into w3).
    b3_f = params["b3"] * dsc + dm

    return dict(
        w1s_t=w1s_f.T.astype(cdt),                       # (H1, S)
        w1a_t=w1a_f.T.astype(cdt),                       # (H1, A)
        b1=b1_f.reshape(H1, 1).astype(jnp.float32),
        w2_t=params["w2"].T.astype(cdt),                 # (H2, H1)
        b2=params["b2"].reshape(H2, 1).astype(jnp.float32),
        w3_t=params["w3"].T.astype(cdt),                 # (S, H2)
        dscale=dsc.reshape(S, 1).astype(jnp.float32),
        b3=b3_f.reshape(S, 1).astype(jnp.float32),
    )


# ---------------------------------------------------------------------------
# pallas_call wrapper (feature-major core + batch-major convenience entry)
# ---------------------------------------------------------------------------
def _forward_fm_impl(state_t, action_t, prep, tile_b, out_dtype):
    """Feature-major core: state_t (S, B), action_t (A, B) -> out (S, B)."""
    cdt = prep["w2_t"].dtype
    S, B = state_t.shape
    A = action_t.shape[0]
    H1 = prep["w1s_t"].shape[0]
    H2 = prep["w2_t"].shape[0]

    Bp = _round_up(B, tile_b)
    st = state_t.astype(cdt)
    at = action_t.astype(cdt)
    if Bp != B:  # zero-pad the last tile on the lane axis; sliced back below
        st = jnp.pad(st, ((0, 0), (0, Bp - B)))
        at = jnp.pad(at, ((0, 0), (0, Bp - B)))

    grid = (Bp // tile_b,)
    batch_spec = lambda F: pl.BlockSpec((F, tile_b), lambda i: (0, i))
    const_spec = lambda R, C: pl.BlockSpec((R, C), lambda i: (0, 0))

    in_specs = [
        batch_spec(S),            # state^T
        batch_spec(A),            # action^T
        const_spec(H1, S),        # W1[:, :S]^T / state_scale  (folded)
        const_spec(H1, A),        # W1[:, S:]^T / action_scale (folded)
        const_spec(H1, 1),        # b1 (folded, f32)
        const_spec(H2, H1),       # W2^T
        const_spec(H2, 1),        # b2 (f32)
        const_spec(S, H2),        # W3^T (unscaled)
        const_spec(S, 1),         # diff_scale (f32)
        const_spec(S, 1),         # b3*diff_scale + diff_mean (f32)
    ]
    out_spec = pl.BlockSpec((S, tile_b), lambda i: (0, i))

    itemsize = jnp.dtype(cdt).itemsize
    flops = 2 * Bp * ((S + A) * H1 + H1 * H2 + H2 * S)
    bytes_accessed = (itemsize * Bp * (S + A)
                      + jnp.dtype(out_dtype).itemsize * Bp * S
                      + itemsize * (S * H1 + A * H1 + H1 * H2 + H2 * S)
                      + 4 * (H1 + H2 + 2 * S))
    cost = pl.CostEstimate(flops=flops, transcendentals=0,
                           bytes_accessed=bytes_accessed)

    fn = pl.pallas_call(
        dynamics_kernel,
        out_shape=jax.ShapeDtypeStruct((S, Bp), out_dtype),
        grid_spec=pltpu.PrefetchScalarGridSpec(
            num_scalar_prefetch=0,
            grid=grid,
            in_specs=in_specs,
            out_specs=out_spec,
        ),
        compiler_params=pltpu.CompilerParams(
            dimension_semantics=("parallel",)),
        cost_estimate=cost,
    )
    out_t = fn(st, at,
               prep["w1s_t"], prep["w1a_t"], prep["b1"],
               prep["w2_t"], prep["b2"],
               prep["w3_t"], prep["dscale"], prep["b3"])
    return out_t[:, :B]


@functools.partial(jax.jit, static_argnums=(3, 4))
def _forward_fm_jit(state_t, action_t, prep, tile_b, out_dtype_name):
    return _forward_fm_impl(state_t, action_t, prep, tile_b,
                            jnp.dtype(out_dtype_name))


@functools.partial(jax.jit, static_argnums=(3, 4))
def _forward_bm_jit(state, action, prep, tile_b, out_dtype_name):
    # Transposes / casts / pad / slice all live under this jit so they fuse
    # with producers / consumers instead of being standalone HBM passes.
    out_t = _forward_fm_impl(state.T, action.T, prep, tile_b,
                             jnp.dtype(out_dtype_name))
    return out_t.T


def dynamics_forward(state, action, prepared, *, tile_b=None,
                     out_dtype=jnp.float32):
    """Batch-major entry: state (B, S), action (B, A) -> (B, S)."""
    if tile_b is None:
        tile_b = _auto_tile_b(state.shape[0], cores=_tensorcores_per_chip())
    return _forward_bm_jit(state, action, prepared, tile_b,
                           jnp.dtype(out_dtype).name)


def dynamics_forward_fm(state_t, action_t, prepared, *, tile_b=None,
                        out_dtype=jnp.float32):
    """Feature-major entry: state_t (S, B), action_t (A, B) -> (S, B).
    Use this when the caller already holds feature-major data: it avoids all
    wrapper-side transposes entirely."""
    if tile_b is None:
        tile_b = _auto_tile_b(state_t.shape[1], cores=_tensorcores_per_chip())
    return _forward_fm_jit(state_t, action_t, prepared, tile_b,
                           jnp.dtype(out_dtype).name)


# ---------------------------------------------------------------------------
# Pure-JAX reference & synthetic params
# ---------------------------------------------------------------------------
def reference_forward(state, action, p):
    """Mirrors DynamicsModel.forward (transform=True, transform_out=True)."""
    s = (state - p["state_mean"]) / p["state_scale"]
    a = (action - p["action_mean"]) / p["action_scale"]
    x = jnp.concatenate([s, a], axis=1)
    w1 = jnp.concatenate([p["w1s"], p["w1a"]], axis=0)
    h = jnp.maximum(x @ w1 + p["b1"], 0.0)
    h = jnp.maximum(h @ p["w2"] + p["b2"], 0.0)
    d = h @ p["w3"] + p["b3"]
    return d * p["diff_scale"] + p["diff_mean"]


def init_params(key, state_dim, action_dim, hidden_sizes=(64, 64)):
    """Deterministic synthetic init (PyTorch-Linear-style uniform fan-in bound)."""
    H1, H2 = hidden_sizes
    in_dim = state_dim + action_dim
    ks = jax.random.split(key, 12)

    def lin(kw, kb, fin, fout):
        bound = 1.0 / jnp.sqrt(jnp.float32(fin))
        w = jax.random.uniform(kw, (fin, fout), jnp.float32, -bound, bound)
        b = jax.random.uniform(kb, (1, fout), jnp.float32, -bound, bound)
        return w, b

    w1, b1 = lin(ks[0], ks[1], in_dim, H1)
    w2, b2 = lin(ks[2], ks[3], H1, H2)
    w3, b3 = lin(ks[4], ks[5], H2, state_dim)

    return {
        "w1s": w1[:state_dim], "w1a": w1[state_dim:], "b1": b1,
        "w2": w2, "b2": b2,
        "w3": w3, "b3": b3,
        # transformation statistics (would come from data in training)
        "state_mean": jax.random.normal(ks[6], (1, state_dim), jnp.float32),
        "state_scale": jnp.abs(jax.random.normal(ks[7], (1, state_dim), jnp.float32)) + 0.5,
        "action_mean": jax.random.normal(ks[8], (1, action_dim), jnp.float32),
        "action_scale": jnp.abs(jax.random.normal(ks[9], (1, action_dim), jnp.float32)) + 0.5,
        "diff_mean": jax.random.normal(ks[10], (1, state_dim), jnp.float32),
        "diff_scale": jnp.abs(jax.random.normal(ks[11], (1, state_dim), jnp.float32)) + 0.5,
    }


# TODO(synk): train_model / optimizer / MSELoss (training loop) are host-side
# PyTorch machinery, not part of the forward pass, and are not translated.

if __name__ == "__main__":
    B, STATE_DIM, ACTION_DIM = 256, 16, 8

    key = jax.random.PRNGKey(0)
    k_s, k_a, k_p = jax.random.split(key, 3)
    state = jax.random.normal(k_s, (B, STATE_DIM), jnp.float32)
    action = jax.random.normal(k_a, (B, ACTION_DIM), jnp.float32)
    params = init_params(k_p, STATE_DIM, ACTION_DIM, hidden_sizes=(64, 64))

    ref = reference_forward(state, action, params)

    # --- f32 path: tight tolerance ---------------------------------------
    prep32 = prepare_params(params, use_bf16=False)
    out32 = jax.block_until_ready(dynamics_forward(state, action, prep32))
    assert out32.shape == (B, STATE_DIM)
    assert jnp.allclose(out32, ref, atol=1e-4, rtol=1e-4), "f32 mismatch vs reference"

    # --- bf16 streaming path (default): documented looser tolerance -------
    # Inputs/weights are bf16-quantized (normalization folded into W1), MXU
    # accumulation + biases + output affine stay f32.
    prep16 = prepare_params(params, use_bf16=True)
    out16 = jax.block_until_ready(dynamics_forward(state, action, prep16))
    max_err = float(jnp.max(jnp.abs(out16 - ref)))
    assert max_err < 0.12, f"bf16 path error too large: {max_err}"

    # --- Ragged batch (zero-pad last tile, slice back) ---------------------
    out_r = jax.block_until_ready(dynamics_forward(state[:100], action[:100], prep32))
    assert out_r.shape == (100, STATE_DIM)
    assert jnp.allclose(out_r, ref[:100], atol=1e-4, rtol=1e-4), "ragged-batch mismatch"

    # --- Feature-major entry (zero wrapper transposes) ---------------------
    out_fm = jax.block_until_ready(dynamics_forward_fm(state.T, action.T, prep32))
    assert out_fm.shape == (STATE_DIM, B)
    assert jnp.allclose(out_fm.T, ref, atol=1e-4, rtol=1e-4), "feature-major mismatch"

    print("KERNEL_OK")
</pallas_src>

<mosaic_0001>
module attributes {stable_mosaic.version = 11 : i64} {
  func.func @dynamics_kernel(%arg0: i32, %arg1: memref<16x256xf32, #tpu.memory_space<vmem>>, %arg2: memref<8x256xf32, #tpu.memory_space<vmem>>, %arg3: memref<64x16xf32, #tpu.memory_space<vmem>>, %arg4: memref<64x8xf32, #tpu.memory_space<vmem>>, %arg5: memref<64x1xf32, #tpu.memory_space<vmem>>, %arg6: memref<64x64xf32, #tpu.memory_space<vmem>>, %arg7: memref<64x1xf32, #tpu.memory_space<vmem>>, %arg8: memref<16x64xf32, #tpu.memory_space<vmem>>, %arg9: memref<16x1xf32, #tpu.memory_space<vmem>>, %arg10: memref<16x1xf32, #tpu.memory_space<vmem>>, %arg11: memref<16x256xf32, #tpu.memory_space<vmem>>) attributes {dimension_semantics = [#tpu.dimension_semantics<parallel>], iteration_bounds = array<i64: 1>, scalar_prefetch = 0 : i64, scratch_operands = 0 : i64, tpu.core_type = #tpu.core_type<tc>, window_params = [{transform_indices = @transform_0, window_bounds = array<i64: 16, 256>}, {transform_indices = @transform_1, window_bounds = array<i64: 8, 256>}, {pipeline_mode = #tpu.pipeline_mode<synchronous>, transform_indices = @transform_2, window_bounds = array<i64: 64, 16>}, {pipeline_mode = #tpu.pipeline_mode<synchronous>, transform_indices = @transform_3, window_bounds = array<i64: 64, 8>}, {pipeline_mode = #tpu.pipeline_mode<synchronous>, transform_indices = @transform_4, window_bounds = array<i64: 64, 1>}, {pipeline_mode = #tpu.pipeline_mode<synchronous>, transform_indices = @transform_5, window_bounds = array<i64: 64, 64>}, {pipeline_mode = #tpu.pipeline_mode<synchronous>, transform_indices = @transform_6, window_bounds = array<i64: 64, 1>}, {pipeline_mode = #tpu.pipeline_mode<synchronous>, transform_indices = @transform_7, window_bounds = array<i64: 16, 64>}, {pipeline_mode = #tpu.pipeline_mode<synchronous>, transform_indices = @transform_8, window_bounds = array<i64: 16, 1>}, {pipeline_mode = #tpu.pipeline_mode<synchronous>, transform_indices = @transform_9, window_bounds = array<i64: 16, 1>}, {transform_indices = @transform_10, window_bounds = array<i64: 16, 256>}]} {
    %c0 = arith.constant 0 : index
    %c0_0 = arith.constant 0 : index
    %0 = vector.load %arg3[%c0, %c0_0] : memref<64x16xf32, #tpu.memory_space<vmem>>, vector<64x16xf32>
    %c0_1 = arith.constant 0 : index
    %c0_2 = arith.constant 0 : index
    %1 = vector.load %arg1[%c0_1, %c0_2] : memref<16x256xf32, #tpu.memory_space<vmem>>, vector<16x256xf32>
    %cst = arith.constant dense<0.000000e+00> : vector<64x256xf32>
    %2 = tpu.matmul %0, %1, %cst {dimension_numbers = #tpu.dot_dimension_numbers<[1], [0], [0], [1], [0, 0, 1, 1], [], []>} : vector<64x16xf32>, vector<16x256xf32>, vector<64x256xf32> -> vector<64x256xf32>
    %c0_3 = arith.constant 0 : index
    %c0_4 = arith.constant 0 : index
    %3 = vector.load %arg4[%c0_3, %c0_4] : memref<64x8xf32, #tpu.memory_space<vmem>>, vector<64x8xf32>
    %c0_5 = arith.constant 0 : index
    %c0_6 = arith.constant 0 : index
    %4 = vector.load %arg2[%c0_5, %c0_6] : memref<8x256xf32, #tpu.memory_space<vmem>>, vector<8x256xf32>
    %cst_7 = arith.constant dense<0.000000e+00> : vector<64x256xf32>
    %5 = tpu.matmul %3, %4, %cst_7 {dimension_numbers = #tpu.dot_dimension_numbers<[1], [0], [0], [1], [0, 0, 1, 1], [], []>} : vector<64x8xf32>, vector<8x256xf32>, vector<64x256xf32> -> vector<64x256xf32>
    %6 = arith.addf %2, %5 : vector<64x256xf32>
    %c0_8 = arith.constant 0 : index
    %c0_9 = arith.constant 0 : index
    %7 = vector.load %arg5[%c0_8, %c0_9] : memref<64x1xf32, #tpu.memory_space<vmem>>, vector<64x1xf32>
    %8 = vector.broadcast %7 : vector<64x1xf32> to vector<64x256xf32>
    %9 = arith.addf %6, %8 : vector<64x256xf32>
    %cst_10 = arith.constant 0.000000e+00 : f32
    %10 = vector.broadcast %cst_10 : f32 to vector<64x256xf32>
    %11 = arith.maximumf %9, %10 : vector<64x256xf32>
    %c0_11 = arith.constant 0 : index
    %c0_12 = arith.constant 0 : index
    %12 = vector.load %arg6[%c0_11, %c0_12] : memref<64x64xf32, #tpu.memory_space<vmem>>, vector<64x64xf32>
    %cst_13 = arith.constant dense<0.000000e+00> : vector<64x256xf32>
    %13 = tpu.matmul %12, %11, %cst_13 {dimension_numbers = #tpu.dot_dimension_numbers<[1], [0], [0], [1], [0, 0, 1, 1], [], []>} : vector<64x64xf32>, vector<64x256xf32>, vector<64x256xf32> -> vector<64x256xf32>
    %c0_14 = arith.constant 0 : index
    %c0_15 = arith.constant 0 : index
    %14 = vector.load %arg7[%c0_14, %c0_15] : memref<64x1xf32, #tpu.memory_space<vmem>>, vector<64x1xf32>
    %15 = vector.broadcast %14 : vector<64x1xf32> to vector<64x256xf32>
    %16 = arith.addf %13, %15 : vector<64x256xf32>
    %cst_16 = arith.constant 0.000000e+00 : f32
    %17 = vector.broadcast %cst_16 : f32 to vector<64x256xf32>
    %18 = arith.maximumf %16, %17 : vector<64x256xf32>
    %c0_17 = arith.constant 0 : index
    %c0_18 = arith.constant 0 : index
    %19 = vector.load %arg8[%c0_17, %c0_18] : memref<16x64xf32, #tpu.memory_space<vmem>>, vector<16x64xf32>
    %cst_19 = arith.constant dense<0.000000e+00> : vector<16x256xf32>
    %20 = tpu.matmul %19, %18, %cst_19 {dimension_numbers = #tpu.dot_dimension_numbers<[1], [0], [0], [1], [0, 0, 1, 1], [], []>} : vector<16x64xf32>, vector<64x256xf32>, vector<16x256xf32> -> vector<16x256xf32>
    %c0_20 = arith.constant 0 : index
    %c0_21 = arith.constant 0 : index
    %21 = vector.load %arg9[%c0_20, %c0_21] : memref<16x1xf32, #tpu.memory_space<vmem>>, vector<16x1xf32>
    %22 = vector.broadcast %21 : vector<16x1xf32> to vector<16x256xf32>
    %23 = arith.mulf %20, %22 : vector<16x256xf32>
    %c0_22 = arith.constant 0 : index
    %c0_23 = arith.constant 0 : index
    %24 = vector.load %arg10[%c0_22, %c0_23] : memref<16x1xf32, #tpu.memory_space<vmem>>, vector<16x1xf32>
    %25 = vector.broadcast %24 : vector<16x1xf32> to vector<16x256xf32>
    %26 = arith.addf %23, %25 : vector<16x256xf32>
    %c0_24 = arith.constant 0 : index
    %c0_25 = arith.constant 0 : index
    %27 = vector.load %arg11[%c0_24, %c0_25] : memref<16x256xf32, #tpu.memory_space<vmem>>, vector<16x256xf32>
    tpu.vector_store %arg11[%c0_24, %c0_25], %26 {strides = array<i32>} : memref<16x256xf32, #tpu.memory_space<vmem>>, vector<16x256xf32>,
    return
  }
  func.func @transform_0(%arg0: i32) -> (i32, i32) {
    %c0_i32 = arith.constant 0 : i32
    %c0_i32_0 = arith.constant 0 : i32
    return %c0_i32, %arg0 : i32, i32
  }
  func.func @transform_1(%arg0: i32) -> (i32, i32) {
    %c0_i32 = arith.constant 0 : i32
    %c0_i32_0 = arith.constant 0 : i32
    return %c0_i32, %arg0 : i32, i32
  }
  func.func @transform_2(%arg0: i32) -> (i32, i32) {
    %c0_i32 = arith.constant 0 : i32
    %c0_i32_0 = arith.constant 0 : i32
    %c0_i32_1 = arith.constant 0 : i32
    return %c0_i32, %c0_i32_0 : i32, i32
  }
  func.func @transform_3(%arg0: i32) -> (i32, i32) {
    %c0_i32 = arith.constant 0 : i32
    %c0_i32_0 = arith.constant 0 : i32
    %c0_i32_1 = arith.constant 0 : i32
    return %c0_i32, %c0_i32_0 : i32, i32
  }
  func.func @transform_4(%arg0: i32) -> (i32, i32) {
    %c0_i32 = arith.constant 0 : i32
    %c0_i32_0 = arith.constant 0 : i32
    %c0_i32_1 = arith.constant 0 : i32
    return %c0_i32, %c0_i32_0 : i32, i32
  }
  func.func @transform_5(%arg0: i32) -> (i32, i32) {
    %c0_i32 = arith.constant 0 : i32
    %c0_i32_0 = arith.constant 0 : i32
    %c0_i32_1 = arith.constant 0 : i32
    return %c0_i32, %c0_i32_0 : i32, i32
  }
  func.func @transform_6(%arg0: i32) -> (i32, i32) {
    %c0_i32 = arith.constant 0 : i32
    %c0_i32_0 = arith.constant 0 : i32
    %c0_i32_1 = arith.constant 0 : i32
    return %c0_i32, %c0_i32_0 : i32, i32
  }
  func.func @transform_7(%arg0: i32) -> (i32, i32) {
    %c0_i32 = arith.constant 0 : i32
    %c0_i32_0 = arith.constant 0 : i32
    %c0_i32_1 = arith.constant 0 : i32
    return %c0_i32, %c0_i32_0 : i32, i32
  }
  func.func @transform_8(%arg0: i32) -> (i32, i32) {
    %c0_i32 = arith.constant 0 : i32
    %c0_i32_0 = arith.constant 0 : i32
    %c0_i32_1 = arith.constant 0 : i32
    return %c0_i32, %c0_i32_0 : i32, i32
  }
  func.func @transform_9(%arg0: i32) -> (i32, i32) {
    %c0_i32 = arith.constant 0 : i32
    %c0_i32_0 = arith.constant 0 : i32
    %c0_i32_1 = arith.constant 0 : i32
    return %c0_i32, %c0_i32_0 : i32, i32
  }
  func.func @transform_10(%arg0: i32) -> (i32, i32) {
    %c0_i32 = arith.constant 0 : i32
    %c0_i32_0 = arith.constant 0 : i32
    return %c0_i32, %arg0 : i32, i32
  }
}

</mosaic_0001>

<llo_original>
// kernel: _forward_bm_jit.1
$region0: #{_forward_bm_jit.1}
  #allocation0 [shape = 'u32[]', space=smem, size = 0x4, offset = 0x4, fixed_abs, tag = 'smem constant byte address 0x4 - core index']
  #allocation1 [shape = 'u32[72,128]{1,0:T(1,128)}', space=vmem, size = 0x9000, scoped, tag = 'internal scratch']
  %s0 = inlined_call_operand.vmem [shape: f32[16,256], index: 0, kind: input, shape index: {}]
  %s1 = inlined_call_operand.vmem [shape: f32[8,256], index: 1, kind: input, shape index: {}]
  %s2 = inlined_call_operand.vmem [shape: f32[64,16], index: 2, kind: input, shape index: {}]
  %s3 = inlined_call_operand.vmem [shape: f32[64,8], index: 3, kind: input, shape index: {}]
  %s4 = inlined_call_operand.vmem [shape: f32[64,1], index: 4, kind: input, shape index: {}]
  %s5 = inlined_call_operand.vmem [shape: f32[64,64], index: 5, kind: input, shape index: {}]
  %s6 = inlined_call_operand.vmem [shape: f32[64,1], index: 6, kind: input, shape index: {}]
  %s7 = inlined_call_operand.vmem [shape: f32[16,64], index: 7, kind: input, shape index: {}]
  %s8 = inlined_call_operand.vmem [shape: f32[16,1], index: 8, kind: input, shape index: {}]
  %s9 = inlined_call_operand.vmem [shape: f32[16,1], index: 9, kind: input, shape index: {}]
  %s10 = inlined_call_operand.hbm [shape: f32[16,256], index: 10, kind: output, shape index: {}]
  %s11 = sld [smem:[#allocation0]]
  $region50: #{_forward_bm_jit.1} parent=0
    _
  %s13 = ssub.s32 1, %s11
  %s14 = scalar_select 0, %s13, %s11
  $region1: #{_forward_bm_jit.1} parent=0
    #allocation2 [shape = 'u8[16384]{0}', space=vmem, size = 0x4000, scoped, tag = 'output window, operand 0, single buffered']
    #allocation3 [shape = 's32[1]{0}', space=sflag, size = 0x4, scoped, tag = 'scoped memory for _forward_bm_jit.1']
    %15 = vsyncpa [#allocation3], 0
    // Predicated region
    $region2: #{_forward_bm_jit.1} parent=1 // pred_check
      _
    $region3: #{_forward_bm_jit.1} parent=1 // pred_check_branch
      %17 = sbr.rel (0) target = $region5
    $region4: #{_forward_bm_jit.1} parent=1 // pred_region
      _
    $region5: #{_forward_bm_jit.1} parent=1 // pred_fallthru
      _
    // Predicated region
    $region6: #{_forward_bm_jit.1} parent=1 // pred_check
      _
    $region7: #{_forward_bm_jit.1} parent=1 // pred_check_branch
      %19 = sbr.rel (0) target = $region9
    $region8: #{_forward_bm_jit.1} parent=1 // pred_region
      _
    $region9: #{_forward_bm_jit.1} parent=1 // pred_fallthru
      _
    // Predicated region
    $region10: #{_forward_bm_jit.1} parent=1 // pred_check
      _
    $region11: #{_forward_bm_jit.1} parent=1 // pred_check_branch
      %21 = sbr.rel (0) target = $region13
    $region12: #{_forward_bm_jit.1} parent=1 // pred_region
      _
    $region13: #{_forward_bm_jit.1} parent=1 // pred_fallthru
      _
    // Predicated region
    $region14: #{_forward_bm_jit.1} parent=1 // pred_check
      _
    $region15: #{_forward_bm_jit.1} parent=1 // pred_check_branch
      %23 = sbr.rel (0) target = $region17
    $region16: #{_forward_bm_jit.1} parent=1 // pred_region
      _
    $region17: #{_forward_bm_jit.1} parent=1 // pred_fallthru
      _
    // Predicated region
    $region18: #{_forward_bm_jit.1} parent=1 // pred_check
      _
    $region19: #{_forward_bm_jit.1} parent=1 // pred_check_branch
      %25 = sbr.rel (0) target = $region21
    $region20: #{_forward_bm_jit.1} parent=1 // pred_region
      _
    $region21: #{_forward_bm_jit.1} parent=1 // pred_fallthru
      _
    // Predicated region
    $region22: #{_forward_bm_jit.1} parent=1 // pred_check
      _
    $region23: #{_forward_bm_jit.1} parent=1 // pred_check_branch
      %27 = sbr.rel (0) target = $region25
    $region24: #{_forward_bm_jit.1} parent=1 // pred_region
      _
    $region25: #{_forward_bm_jit.1} parent=1 // pred_fallthru
      _
    // Predicated region
    $region26: #{_forward_bm_jit.1} parent=1 // pred_check
      _
    $region27: #{_forward_bm_jit.1} parent=1 // pred_check_branch
      %29 = sbr.rel (0) target = $region29
    $region28: #{_forward_bm_jit.1} parent=1 // pred_region
      _
    $region29: #{_forward_bm_jit.1} parent=1 // pred_fallthru
      _
    // Predicated region
    $region30: #{_forward_bm_jit.1} parent=1 // pred_check
      _
    $region31: #{_forward_bm_jit.1} parent=1 // pred_check_branch
      %31 = sbr.rel (0) target = $region33
    $region32: #{_forward_bm_jit.1} parent=1 // pred_region
      _
    $region33: #{_forward_bm_jit.1} parent=1 // pred_fallthru
      _
    // Predicated region
    $region34: #{_forward_bm_jit.1} parent=1 // pred_check
      _
    $region35: #{_forward_bm_jit.1} parent=1 // pred_check_branch
      %33 = sbr.rel (0) target = $region37
    $region36: #{_forward_bm_jit.1} parent=1 // pred_region
      _
    $region37: #{_forward_bm_jit.1} parent=1 // pred_fallthru
      _
    // Predicated region
    $region38: #{_forward_bm_jit.1} parent=1 // pred_check
      _
    $region39: #{_forward_bm_jit.1} parent=1 // pred_check_branch
      %35 = sbr.rel (0) target = $region41
    $region40: #{_forward_bm_jit.1} parent=1 // pred_region
      _
    $region41: #{_forward_bm_jit.1} parent=1 // pred_fallthru
      _
    %v36 = vld [vmem:[%s2] sm:$0xff]
    %v37 = vld [vmem:[%s2 + $0x8] sm:$0xff]
    %v38 = vld [vmem:[%s2 + $0x10] sm:$0xff]
    %v39 = vld [vmem:[%s2 + $0x18] sm:$0xff]
    %v40 = vld [vmem:[%s2 + $0x20] sm:$0xff]
    %v41 = vld [vmem:[%s2 + $0x28] sm:$0xff]
    %v42 = vld [vmem:[%s2 + $0x30] sm:$0xff]
    %v43 = vld [vmem:[%s2 + $0x38] sm:$0xff]
    %v44 = vld [vmem:[%s0] sm:$0xff]
    %v45 = vld [vmem:[%s0 + $0x8] sm:$0xff]
    %v46 = vld [vmem:[%s0 + $0x10] sm:$0xff]
    %v47 = vld [vmem:[%s0 + $0x18] sm:$0xff]
    %v48 = vld [vmem:[%s3] sm:$0xff]
    %v49 = vld [vmem:[%s3 + $0x8] sm:$0xff]
    %v50 = vld [vmem:[%s3 + $0x10] sm:$0xff]
    %v51 = vld [vmem:[%s3 + $0x18] sm:$0xff]
    %v52 = vld [vmem:[%s3 + $0x20] sm:$0xff]
    %v53 = vld [vmem:[%s3 + $0x28] sm:$0xff]
    %v54 = vld [vmem:[%s3 + $0x30] sm:$0xff]
    %v55 = vld [vmem:[%s3 + $0x38] sm:$0xff]
    %v56 = vld [vmem:[%s1] sm:$0xff]
    %v57 = vld [vmem:[%s1 + $0x8] sm:$0xff]
    %vm58 = vcmask 64512
    %v60 = vsel %vm58, %v48, 0
    %v63 = vsel %vm58, %v49, 0
    %v66 = vsel %vm58, %v50, 0
    %v69 = vsel %vm58, %v51, 0
    %v72 = vsel %vm58, %v52, 0
    %v75 = vsel %vm58, %v53, 0
    %v78 = vsel %vm58, %v54, 0
    %v81 = vsel %vm58, %v55, 0
    %83 = vmatpush.msra.mxu0 0.0
    %84 = vmatpush.msra.mxu0 0.0
    %85 = vmatpush.msra.mxu0 0.0
    %86 = vmatpush.msra.mxu0 0.0
    %87 = vmatpush.msra.mxu0 0.0
    %88 = vmatpush.msra.mxu0 0.0
    %89 = vmatpush.msra.mxu0 0.0
    %90 = vmatpush.msra.mxu0 0.0
    %91 = vmatpush.msra.mxu0 0.0
    %92 = vmatpush.msra.mxu0 0.0
    %93 = vmatpush.msra.mxu0 0.0
    %94 = vmatpush.msra.mxu0 0.0
    %95 = vmatpush.msra.mxu0 0.0
    %96 = vmatpush.msra.mxu0 0.0
    %97 = vmatpush.msra.mxu0 0.0
    %98 = vmatpush.msra.mxu0 %v56
    %99 = vmatmul.f32.gmra.mxu0 %v60
    %v100 = vpop.f32.mrf.mxu0
    %v101 = vadd.f32 0.0, %v100
    %102 = vmatmul.f32.gmra.mxu0 %v63
    %v103 = vpop.f32.mrf.mxu0
    %v104 = vadd.f32 0.0, %v103
    %105 = vmatmul.f32.gmra.mxu0 %v66
    %v106 = vpop.f32.mrf.mxu0
    %v107 = vadd.f32 0.0, %v106
    %108 = vmatmul.f32.gmra.mxu0 %v69
    %v109 = vpop.f32.mrf.mxu0
    %v110 = vadd.f32 0.0, %v109
    %111 = vmatmul.f32.gmra.mxu0 %v72
    %v112 = vpop.f32.mrf.mxu0
    %v113 = vadd.f32 0.0, %v112
    %114 = vmatmul.f32.gmra.mxu0 %v75
    %v115 = vpop.f32.mrf.mxu0
    %v116 = vadd.f32 0.0, %v115
    %117 = vmatmul.f32.gmra.mxu0 %v78
    %v118 = vpop.f32.mrf.mxu0
    %v119 = vadd.f32 0.0, %v118
    %120 = vmatmul.f32.gmra.mxu0 %v81
    %v121 = vpop.f32.mrf.mxu0
    %v122 = vadd.f32 0.0, %v121
    %123 = vdwg.mxu0
    %124 = vmatpush.msra.mxu0 0.0
    %125 = vmatpush.msra.mxu0 0.0
    %126 = vmatpush.msra.mxu0 0.0
    %127 = vmatpush.msra.mxu0 0.0
    %128 = vmatpush.msra.mxu0 0.0
    %129 = vmatpush.msra.mxu0 0.0
    %130 = vmatpush.msra.mxu0 0.0
    %131 = vmatpush.msra.mxu0 0.0
    %132 = vmatpush.msra.mxu0 0.0
    %133 = vmatpush.msra.mxu0 0.0
    %134 = vmatpush.msra.mxu0 0.0
    %135 = vmatpush.msra.mxu0 0.0
    %136 = vmatpush.msra.mxu0 0.0
    %137 = vmatpush.msra.mxu0 0.0
    %138 = vmatpush.msra.mxu0 0.0
    %139 = vmatpush.msra.mxu0 %v57
    %140 = vmatmul.f32.gmra.mxu0 %v60
    %v141 = vpop.f32.mrf.mxu0
    %v142 = vadd.f32 0.0, %v141
    %143 = vmatmul.f32.gmra.mxu0 %v63
    %v144 = vpop.f32.mrf.mxu0
    %v145 = vadd.f32 0.0, %v144
    %146 = vmatmul.f32.gmra.mxu0 %v66
    %v147 = vpop.f32.mrf.mxu0
    %v148 = vadd.f32 0.0, %v147
    %149 = vmatmul.f32.gmra.mxu0 %v69
    %v150 = vpop.f32.mrf.mxu0
    %v151 = vadd.f32 0.0, %v150
    %152 = vmatmul.f32.gmra.mxu0 %v72
    %v153 = vpop.f32.mrf.mxu0
    %v154 = vadd.f32 0.0, %v153
    %155 = vmatmul.f32.gmra.mxu0 %v75
    %v156 = vpop.f32.mrf.mxu0
    %v157 = vadd.f32 0.0, %v156
    %158 = vmatmul.f32.gmra.mxu0 %v78
    %v159 = vpop.f32.mrf.mxu0
    %v160 = vadd.f32 0.0, %v159
    %161 = vmatmul.f32.gmra.mxu0 %v81
    %v162 = vpop.f32.mrf.mxu0
    %v163 = vadd.f32 0.0, %v162
    %164 = vdwg.mxu0
    %vm165 = vcmask 130048
    %v167 = vsel %vm165, %v36, 0
    %v170 = vsel %vm165, %v37, 0
    %v173 = vsel %vm165, %v38, 0
    %v176 = vsel %vm165, %v39, 0
    %v179 = vsel %vm165, %v40, 0
    %v182 = vsel %vm165, %v41, 0
    %v185 = vsel %vm165, %v42, 0
    %v188 = vsel %vm165, %v43, 0
    %190 = vmatpush.msra.mxu0 0.0
    %191 = vmatpush.msra.mxu0 0.0
    %192 = vmatpush.msra.mxu0 0.0
    %193 = vmatpush.msra.mxu0 0.0
    %194 = vmatpush.msra.mxu0 0.0
    %195 = vmatpush.msra.mxu0 0.0
    %196 = vmatpush.msra.mxu0 0.0
    %197 = vmatpush.msra.mxu0 0.0
    %198 = vmatpush.msra.mxu0 0.0
    %199 = vmatpush.msra.mxu0 0.0
    %200 = vmatpush.msra.mxu0 0.0
    %201 = vmatpush.msra.mxu0 0.0
    %202 = vmatpush.msra.mxu0 0.0
    %203 = vmatpush.msra.mxu0 0.0
    %204 = vmatpush.msra.mxu0 %v46
    %205 = vmatpush.msra.mxu0 %v44
    %206 = vmatmul.f32.gmra.mxu0 %v167
    %v207 = vpop.f32.mrf.mxu0
    %v208 = vadd.f32 %v101, %v207
    %209 = vmatmul.f32.gmra.mxu0 %v170
    %v210 = vpop.f32.mrf.mxu0
    %v211 = vadd.f32 %v104, %v210
    %212 = vmatmul.f32.gmra.mxu0 %v173
    %v213 = vpop.f32.mrf.mxu0
    %v214 = vadd.f32 %v107, %v213
    %215 = vmatmul.f32.gmra.mxu0 %v176
    %v216 = vpop.f32.mrf.mxu0
    %v217 = vadd.f32 %v110, %v216
    %218 = vmatmul.f32.gmra.mxu0 %v179
    %v219 = vpop.f32.mrf.mxu0
    %v220 = vadd.f32 %v113, %v219
    %221 = vmatmul.f32.gmra.mxu0 %v182
    %v222 = vpop.f32.mrf.mxu0
    %v223 = vadd.f32 %v116, %v222
    %224 = vmatmul.f32.gmra.mxu0 %v185
    %v225 = vpop.f32.mrf.mxu0
    %v226 = vadd.f32 %v119, %v225
    %227 = vmatmul.f32.gmra.mxu0 %v188
    %v228 = vpop.f32.mrf.mxu0
    %v229 = vadd.f32 %v122, %v228
    %230 = vdwg.mxu0
    %231 = vmatpush.msra.mxu0 0.0
    %232 = vmatpush.msra.mxu0 0.0
    %233 = vmatpush.msra.mxu0 0.0
    %234 = vmatpush.msra.mxu0 0.0
    %235 = vmatpush.msra.mxu0 0.0
    %236 = vmatpush.msra.mxu0 0.0
    %237 = vmatpush.msra.mxu0 0.0
    %238 = vmatpush.msra.mxu0 0.0
    %239 = vmatpush.msra.mxu0 0.0
    %240 = vmatpush.msra.mxu0 0.0
    %241 = vmatpush.msra.mxu0 0.0
    %242 = vmatpush.msra.mxu0 0.0
    %243 = vmatpush.msra.mxu0 0.0
    %244 = vmatpush.msra.mxu0 0.0
    %245 = vmatpush.msra.mxu0 %v47
    %246 = vmatpush.msra.mxu0 %v45
    %247 = vmatmul.f32.gmra.mxu0 %v167
    %v248 = vpop.f32.mrf.mxu0
    %v249 = vadd.f32 %v142, %v248
    %250 = vmatmul.f32.gmra.mxu0 %v170
    %v251 = vpop.f32.mrf.mxu0
    %v252 = vadd.f32 %v145, %v251
    %253 = vmatmul.f32.gmra.mxu0 %v173
    %v254 = vpop.f32.mrf.mxu0
    %v255 = vadd.f32 %v148, %v254
    %256 = vmatmul.f32.gmra.mxu0 %v176
    %v257 = vpop.f32.mrf.mxu0
    %v258 = vadd.f32 %v151, %v257
    %259 = vmatmul.f32.gmra.mxu0 %v179
    %v260 = vpop.f32.mrf.mxu0
    %v261 = vadd.f32 %v154, %v260
    %262 = vmatmul.f32.gmra.mxu0 %v182
    %v263 = vpop.f32.mrf.mxu0
    %v264 = vadd.f32 %v157, %v263
    %265 = vmatmul.f32.gmra.mxu0 %v185
    %v266 = vpop.f32.mrf.mxu0
    %v267 = vadd.f32 %v160, %v266
    %268 = vmatmul.f32.gmra.mxu0 %v188
    %v269 = vpop.f32.mrf.mxu0
    %v270 = vadd.f32 %v163, %v269
    %271 = vdwg.mxu0
    %v272 = vld [vmem:[%s4] sm:$0xff]
    %v273 = vld [vmem:[%s4 + $0x8] sm:$0xff]
    %v274 = vld [vmem:[%s4 + $0x10] sm:$0xff]
    %v275 = vld [vmem:[%s4 + $0x18] sm:$0xff]
    %v276 = vld [vmem:[%s4 + $0x20] sm:$0xff]
    %v277 = vld [vmem:[%s4 + $0x28] sm:$0xff]
    %v278 = vld [vmem:[%s4 + $0x30] sm:$0xff]
    %v279 = vld [vmem:[%s4 + $0x38] sm:$0xff]
    %281 = vset.pattern.permute.xlu0 0
    %282 = vperm.xlu0 %281, %v272
    %v283 = vpop.permute.xlu0 %282
    %286 = vset.pattern.permute.xlu0 0
    %287 = vperm.xlu0 %286, %v273
    %v288 = vpop.permute.xlu0 %287
    %291 = vset.pattern.permute.xlu0 0
    %292 = vperm.xlu0 %291, %v274
    %v293 = vpop.permute.xlu0 %292
    %296 = vset.pattern.permute.xlu0 0
    %297 = vperm.xlu0 %296, %v275
    %v298 = vpop.permute.xlu0 %297
    %301 = vset.pattern.permute.xlu0 0
    %302 = vperm.xlu0 %301, %v276
    %v303 = vpop.permute.xlu0 %302
    %306 = vset.pattern.permute.xlu0 0
    %307 = vperm.xlu0 %306, %v277
    %v308 = vpop.permute.xlu0 %307
    %311 = vset.pattern.permute.xlu0 0
    %312 = vperm.xlu0 %311, %v278
    %v313 = vpop.permute.xlu0 %312
    %316 = vset.pattern.permute.xlu0 0
    %317 = vperm.xlu0 %316, %v279
    %v318 = vpop.permute.xlu0 %317
    %v320 = vadd.f32 %v208, %v283
    %v321 = vadd.f32 %v249, %v283
    %v322 = vadd.f32 %v211, %v288
    %v323 = vadd.f32 %v252, %v288
    %v324 = vadd.f32 %v214, %v293
    %v325 = vadd.f32 %v255, %v293
    %v326 = vadd.f32 %v217, %v298
    %v327 = vadd.f32 %v258, %v298
    %v328 = vadd.f32 %v220, %v303
    %v329 = vadd.f32 %v261, %v303
    %v330 = vadd.f32 %v223, %v308
    %v331 = vadd.f32 %v264, %v308
    %v332 = vadd.f32 %v226, %v313
    %v333 = vadd.f32 %v267, %v313
    %v334 = vadd.f32 %v229, %v318
    %v335 = vadd.f32 %v270, %v318
    %v336 = vmax.f32 %v320, 0.0
    %v337 = vmax.f32 %v321, 0.0
    %v338 = vmax.f32 %v322, 0.0
    %v339 = vmax.f32 %v323, 0.0
    %v340 = vmax.f32 %v324, 0.0
    %v341 = vmax.f32 %v325, 0.0
    %v342 = vmax.f32 %v326, 0.0
    %v343 = vmax.f32 %v327, 0.0
    %v344 = vmax.f32 %v328, 0.0
    %v345 = vmax.f32 %v329, 0.0
    %v346 = vmax.f32 %v330, 0.0
    %v347 = vmax.f32 %v331, 0.0
    %v348 = vmax.f32 %v332, 0.0
    %v349 = vmax.f32 %v333, 0.0
    %v350 = vmax.f32 %v334, 0.0
    %v351 = vmax.f32 %v335, 0.0
    %v352 = vld [vmem:[%s5] sm:$0xff]
    %v353 = vld [vmem:[%s5 + $0x8] sm:$0xff]
    %v354 = vld [vmem:[%s5 + $0x10] sm:$0xff]
    %v355 = vld [vmem:[%s5 + $0x18] sm:$0xff]
    %v356 = vld [vmem:[%s5 + $0x20] sm:$0xff]
    %v357 = vld [vmem:[%s5 + $0x28] sm:$0xff]
    %v358 = vld [vmem:[%s5 + $0x30] sm:$0xff]
    %v359 = vld [vmem:[%s5 + $0x38] sm:$0xff]
    %v360 = vld [vmem:[%s6] sm:$0xff]
    %v361 = vld [vmem:[%s6 + $0x8] sm:$0xff]
    %v362 = vld [vmem:[%s6 + $0x10] sm:$0xff]
    %v363 = vld [vmem:[%s6 + $0x18] sm:$0xff]
    %v364 = vld [vmem:[%s6 + $0x20] sm:$0xff]
    %v365 = vld [vmem:[%s6 + $0x28] sm:$0xff]
    %v366 = vld [vmem:[%s6 + $0x30] sm:$0xff]
    %v367 = vld [vmem:[%s6 + $0x38] sm:$0xff]
    %369 = vset.pattern.permute.xlu0 0
    %370 = vperm.xlu0 %369, %v360
    %v371 = vpop.permute.xlu0 %370
    %374 = vset.pattern.permute.xlu0 0
    %375 = vperm.xlu0 %374, %v361
    %v376 = vpop.permute.xlu0 %375
    %379 = vset.pattern.permute.xlu0 0
    %380 = vperm.xlu0 %379, %v362
    %v381 = vpop.permute.xlu0 %380
    %384 = vset.pattern.permute.xlu0 0
    %385 = vperm.xlu0 %384, %v363
    %v386 = vpop.permute.xlu0 %385
    %389 = vset.pattern.permute.xlu0 0
    %390 = vperm.xlu0 %389, %v364
    %v391 = vpop.permute.xlu0 %390
    %394 = vset.pattern.permute.xlu0 0
    %395 = vperm.xlu0 %394, %v365
    %v396 = vpop.permute.xlu0 %395
    %399 = vset.pattern.permute.xlu0 0
    %400 = vperm.xlu0 %399, %v366
    %v401 = vpop.permute.xlu0 %400
    %404 = vset.pattern.permute.xlu0 0
    %405 = vperm.xlu0 %404, %v367
    %v406 = vpop.permute.xlu0 %405
    %vm408 = vcmask 523264
    %v410 = vsel %vm408, %v352, 0
    %v413 = vsel %vm408, %v353, 0
    %v416 = vsel %vm408, %v354, 0
    %v419 = vsel %vm408, %v355, 0
    %v422 = vsel %vm408, %v356, 0
    %v425 = vsel %vm408, %v357, 0
    %v428 = vsel %vm408, %v358, 0
    %v431 = vsel %vm408, %v359, 0
    %433 = vmatpush.msra.mxu0 0.0
    %434 = vmatpush.msra.mxu0 0.0
    %435 = vmatpush.msra.mxu0 0.0
    %436 = vmatpush.msra.mxu0 0.0
    %437 = vmatpush.msra.mxu0 0.0
    %438 = vmatpush.msra.mxu0 0.0
    %439 = vmatpush.msra.mxu0 0.0
    %440 = vmatpush.msra.mxu0 0.0
    %441 = vmatpush.msra.mxu0 %v350
    %442 = vmatpush.msra.mxu0 %v348
    %443 = vmatpush.msra.mxu0 %v346
    %444 = vmatpush.msra.mxu0 %v344
    %445 = vmatpush.msra.mxu0 %v342
    %446 = vmatpush.msra.mxu0 %v340
    %447 = vmatpush.msra.mxu0 %v338
    %448 = vmatpush.msra.mxu0 %v336
    %449 = vmatmul.f32.gmra.mxu0 %v410
    %v450 = vpop.f32.mrf.mxu0
    %v451 = vadd.f32 %v371, %v450
    %452 = vmatmul.f32.gmra.mxu0 %v413
    %v453 = vpop.f32.mrf.mxu0
    %v454 = vadd.f32 %v376, %v453
    %455 = vmatmul.f32.gmra.mxu0 %v416
    %v456 = vpop.f32.mrf.mxu0
    %v457 = vadd.f32 %v381, %v456
    %458 = vmatmul.f32.gmra.mxu0 %v419
    %v459 = vpop.f32.mrf.mxu0
    %v460 = vadd.f32 %v386, %v459
    %461 = vmatmul.f32.gmra.mxu0 %v422
    %v462 = vpop.f32.mrf.mxu0
    %v463 = vadd.f32 %v391, %v462
    %464 = vmatmul.f32.gmra.mxu0 %v425
    %v465 = vpop.f32.mrf.mxu0
    %v466 = vadd.f32 %v396, %v465
    %467 = vmatmul.f32.gmra.mxu0 %v428
    %v468 = vpop.f32.mrf.mxu0
    %v469 = vadd.f32 %v401, %v468
    %470 = vmatmul.f32.gmra.mxu0 %v431
    %v471 = vpop.f32.mrf.mxu0
    %v472 = vadd.f32 %v406, %v471
    %473 = vdwg.mxu0
    %474 = vmatpush.msra.mxu0 0.0
    %475 = vmatpush.msra.mxu0 0.0
    %476 = vmatpush.msra.mxu0 0.0
    %477 = vmatpush.msra.mxu0 0.0
    %478 = vmatpush.msra.mxu0 0.0
    %479 = vmatpush.msra.mxu0 0.0
    %480 = vmatpush.msra.mxu0 0.0
    %481 = vmatpush.msra.mxu0 0.0
    %482 = vmatpush.msra.mxu0 %v351
    %483 = vmatpush.msra.mxu0 %v349
    %484 = vmatpush.msra.mxu0 %v347
    %485 = vmatpush.msra.mxu0 %v345
    %486 = vmatpush.msra.mxu0 %v343
    %487 = vmatpush.msra.mxu0 %v341
    %488 = vmatpush.msra.mxu0 %v339
    %489 = vmatpush.msra.mxu0 %v337
    %490 = vmatmul.f32.gmra.mxu0 %v410
    %v491 = vpop.f32.mrf.mxu0
    %v492 = vadd.f32 %v371, %v491
    %493 = vmatmul.f32.gmra.mxu0 %v413
    %v494 = vpop.f32.mrf.mxu0
    %v495 = vadd.f32 %v376, %v494
    %496 = vmatmul.f32.gmra.mxu0 %v416
    %v497 = vpop.f32.mrf.mxu0
    %v498 = vadd.f32 %v381, %v497
    %499 = vmatmul.f32.gmra.mxu0 %v419
    %v500 = vpop.f32.mrf.mxu0
    %v501 = vadd.f32 %v386, %v500
    %502 = vmatmul.f32.gmra.mxu0 %v422
    %v503 = vpop.f32.mrf.mxu0
    %v504 = vadd.f32 %v391, %v503
    %505 = vmatmul.f32.gmra.mxu0 %v425
    %v506 = vpop.f32.mrf.mxu0
    %v507 = vadd.f32 %v396, %v506
    %508 = vmatmul.f32.gmra.mxu0 %v428
    %v509 = vpop.f32.mrf.mxu0
    %v510 = vadd.f32 %v401, %v509
    %511 = vmatmul.f32.gmra.mxu0 %v431
    %v512 = vpop.f32.mrf.mxu0
    %v513 = vadd.f32 %v406, %v512
    %514 = vdwg.mxu0
    %v515 = vmax.f32 %v451, 0.0
    %v516 = vmax.f32 %v492, 0.0
    %v517 = vmax.f32 %v454, 0.0
    %v518 = vmax.f32 %v495, 0.0
    %v519 = vmax.f32 %v457, 0.0
    %v520 = vmax.f32 %v498, 0.0
    %v521 = vmax.f32 %v460, 0.0
    %v522 = vmax.f32 %v501, 0.0
    %v523 = vmax.f32 %v463, 0.0
    %v524 = vmax.f32 %v504, 0.0
    %v525 = vmax.f32 %v466, 0.0
    %v526 = vmax.f32 %v507, 0.0
    %v527 = vmax.f32 %v469, 0.0
    %v528 = vmax.f32 %v510, 0.0
    %v529 = vmax.f32 %v472, 0.0
    %v530 = vmax.f32 %v513, 0.0
    %v531 = vld [vmem:[%s7] sm:$0xff]
    %v532 = vld [vmem:[%s7 + $0x8] sm:$0xff]
    %v534 = vsel %vm408, %v531, 0
    %v537 = vsel %vm408, %v532, 0
    %539 = vmatpush.msra.mxu0 0.0
    %540 = vmatpush.msra.mxu0 0.0
    %541 = vmatpush.msra.mxu0 0.0
    %542 = vmatpush.msra.mxu0 0.0
    %543 = vmatpush.msra.mxu0 0.0
    %544 = vmatpush.msra.mxu0 0.0
    %545 = vmatpush.msra.mxu0 0.0
    %546 = vmatpush.msra.mxu0 0.0
    %547 = vmatpush.msra.mxu0 %v529
    %548 = vmatpush.msra.mxu0 %v527
    %549 = vmatpush.msra.mxu0 %v525
    %550 = vmatpush.msra.mxu0 %v523
    %551 = vmatpush.msra.mxu0 %v521
    %552 = vmatpush.msra.mxu0 %v519
    %553 = vmatpush.msra.mxu0 %v517
    %554 = vmatpush.msra.mxu0 %v515
    %555 = vmatmul.f32.gmra.mxu0 %v534
    %v556 = vpop.f32.mrf.mxu0
    %v557 = vadd.f32 0.0, %v556
    %558 = vmatmul.f32.gmra.mxu0 %v537
    %v559 = vpop.f32.mrf.mxu0
    %v560 = vadd.f32 0.0, %v559
    %561 = vdwg.mxu0
    %562 = vmatpush.msra.mxu0 0.0
    %563 = vmatpush.msra.mxu0 0.0
    %564 = vmatpush.msra.mxu0 0.0
    %565 = vmatpush.msra.mxu0 0.0
    %566 = vmatpush.msra.mxu0 0.0
    %567 = vmatpush.msra.mxu0 0.0
    %568 = vmatpush.msra.mxu0 0.0
    %569 = vmatpush.msra.mxu0 0.0
    %570 = vmatpush.msra.mxu0 %v530
    %571 = vmatpush.msra.mxu0 %v528
    %572 = vmatpush.msra.mxu0 %v526
    %573 = vmatpush.msra.mxu0 %v524
    %574 = vmatpush.msra.mxu0 %v522
    %575 = vmatpush.msra.mxu0 %v520
    %576 = vmatpush.msra.mxu0 %v518
    %577 = vmatpush.msra.mxu0 %v516
    %578 = vmatmul.f32.gmra.mxu0 %v534
    %v579 = vpop.f32.mrf.mxu0
    %v580 = vadd.f32 0.0, %v579
    %581 = vmatmul.f32.gmra.mxu0 %v537
    %v582 = vpop.f32.mrf.mxu0
    %v583 = vadd.f32 0.0, %v582
    %584 = vdwg.mxu0
    %v585 = vld [vmem:[%s8] sm:$0xff]
    %v586 = vld [vmem:[%s8 + $0x8] sm:$0xff]
    %588 = vset.pattern.permute.xlu0 0
    %589 = vperm.xlu0 %588, %v585
    %v590 = vpop.permute.xlu0 %589
    %593 = vset.pattern.permute.xlu0 0
    %594 = vperm.xlu0 %593, %v586
    %v595 = vpop.permute.xlu0 %594
    %v597 = vmul.f32 %v557, %v590
    %v598 = vmul.f32 %v580, %v590
    %v599 = vmul.f32 %v560, %v595
    %v600 = vmul.f32 %v583, %v595
    %v601 = vld [vmem:[%s9] sm:$0xff]
    %v602 = vld [vmem:[%s9 + $0x8] sm:$0xff]
    %604 = vset.pattern.permute.xlu0 0
    %605 = vperm.xlu0 %604, %v601
    %v606 = vpop.permute.xlu0 %605
    %609 = vset.pattern.permute.xlu0 0
    %610 = vperm.xlu0 %609, %v602
    %v611 = vpop.permute.xlu0 %610
    %v613 = vadd.f32 %v597, %v606
    %v614 = vadd.f32 %v598, %v606
    %v615 = vadd.f32 %v599, %v611
    %v616 = vadd.f32 %v600, %v611
    %617 = vst [vmem:[#allocation2] sm:$0xff] %v613
    %618 = vst [vmem:[#allocation2 + $0x8] sm:$0xff] %v614
    %619 = vst [vmem:[#allocation2 + $0x10] sm:$0xff] %v615
    %620 = vst [vmem:[#allocation2 + $0x18] sm:$0xff] %v616
    // Predicated region
    $region42: #{_forward_bm_jit.1} parent=1 // pred_check
      _
    $region43: #{_forward_bm_jit.1} parent=1 // pred_check_branch
      %622 = sbr.rel (0) target = $region45
    $region44: #{_forward_bm_jit.1} parent=1 // pred_region
      %624 = vsyncadd [#allocation3], 0
      %s625 = sshll.u32 [#allocation2], 4
      %s626 = int_to_ptr.vmem [resolvable:$true] %s625
      %s627 = sshll.u32 %s10, 4
      %s628 = int_to_ptr.hbm [resolvable:$true] %s627
      %633 = dma.vmem_to_hbm [thread:$0]  %s626, 512, %s628, [#allocation3], 256, 256, 16
    $region45: #{_forward_bm_jit.1} parent=1 // pred_fallthru
      _
    // Predicated region
    $region46: #{_forward_bm_jit.1} parent=1 // pred_check
      _
    $region47: #{_forward_bm_jit.1} parent=1 // pred_check_branch
      %635 = sbr.rel (0) target = $region49
    $region48: #{_forward_bm_jit.1} parent=1 // pred_region
      %637 = dma.done [#allocation3], 512
    $region49: #{_forward_bm_jit.1} parent=1 // pred_fallthru
      _
    %638 = vsyncpa [#allocation3], 1

</llo_original>
